<compile_context>
chip_gen: v7x
topology: tpu7x:2x2x1
jax: 0.10.0
libtpu: 0.0.40
codegen_flags: <defaults>
</compile_context>

<pallas_src>
import functools

import jax
import jax.numpy as jnp
from jax.experimental import pallas as pl
from jax.experimental.pallas import tpu as pltpu


_SENTINEL = 1e8  # padded points are very far away -> never the nearest neighbor


def _ceil_to(v, k):
    return ((v + k - 1) // k) * k


def _make_chamfer_kernel(m, n, m_pad, tn, tm, nj, ni):
    inv_m = 1.0 / float(m)
    inv_n = 1.0 / float(n)

    def kernel(y_ref, x_ref, out_ref, colmin_ref, rowmin_ref):
        j = pl.program_id(1)   # n-tile index (outer reduction axis)
        i = pl.program_id(2)   # m-tile index (inner reduction axis)

        # ---- per-batch init (first reduction step of this batch) -----------------
        @pl.when(jnp.logical_and(j == 0, i == 0))
        def _():
            colmin_ref[...] = jnp.full((8, m_pad), jnp.inf, jnp.float32)
            out_ref[...] = jnp.zeros((1, 8, 128), jnp.float32)

        # ---- per-row-block init (first m tile of this n tile) --------------------
        @pl.when(i == 0)
        def _():
            rowmin_ref[...] = jnp.full((tn, 128), jnp.inf, jnp.float32)

        # ---- pairwise SQUARED distances for this (tn, tm) tile, on the MXU -------
        # y_aug[j,:] = [y0, y1, y2, 1, |y|^2, 0, 0, 0]
        # x_aug[:,i] = [-2x0, -2x1, -2x2, |x|^2, 1, 0, 0, 0]
        # => (y_aug @ x_aug)[j, i] = |x_i|^2 + |y_j|^2 - 2 x_i . y_j
        y_t = y_ref[0]                                   # (tn, 8)  f32
        x_t = x_ref[0]                                   # (8, tm)  f32
        d2 = jnp.dot(y_t, x_t, preferred_element_type=jnp.float32)   # (tn, tm)

        # ---- dis1 path: running column-min over all y (n) tiles. -----------------
        # Elementwise (VALU) min of the tn//8 sublane groups; the cross-sublane
        # reduce is deferred to the single per-batch finalize below.
        p8 = d2[0:8, :]
        for s in range(1, tn // 8):
            p8 = jnp.minimum(p8, d2[s * 8:(s + 1) * 8, :])
        coff = pl.multiple_of(i * tm, 128)
        colmin_ref[:, pl.ds(coff, tm)] = jnp.minimum(
            colmin_ref[:, pl.ds(coff, tm)], p8)

        # ---- dis2 path: running lane-partial row-min over all x (m) tiles. -------
        lp = d2[:, 0:128]
        for k in range(1, tm // 128):
            lp = jnp.minimum(lp, d2[:, k * 128:(k + 1) * 128])
        rowmin_ref[...] = jnp.minimum(rowmin_ref[...], lp)

        # ---- finalize this row block's dis2 contribution (once per n tile) -------
        @pl.when(i == ni - 1)
        def _():
            rmin = jnp.min(rowmin_ref[...], axis=1, keepdims=True)    # (tn, 1)
            rdist = jnp.sqrt(jnp.maximum(rmin, 0.0))
            rows = j * tn + jax.lax.broadcasted_iota(jnp.int32, (tn, 1), 0)
            rdist = jnp.where(rows < n, rdist, 0.0)   # drop padded y points
            bs = jnp.sum(rdist, axis=0, keepdims=True)                # (1, 1)
            out_ref[...] = out_ref[...] + bs * inv_n

        # ---- finalize dis1 (once per batch, at the very last reduction step) -----
        @pl.when(jnp.logical_and(j == nj - 1, i == ni - 1))
        def _():
            cmin = jnp.min(colmin_ref[...], axis=0, keepdims=True)    # (1, m_pad)
            cdist = jnp.sqrt(jnp.maximum(cmin, 0.0))
            cols = jax.lax.broadcasted_iota(jnp.int32, (1, m_pad), 1)
            cdist = jnp.where(cols < m, cdist, 0.0)   # drop padded x points
            cs = jnp.sum(cdist, axis=1, keepdims=True)                # (1, 1)
            out_ref[...] = out_ref[...] + cs * inv_m

    return kernel


def _augment(x, y, m_pad, n_pad):
    """Pad to tile multiples and build the augmented-coordinate arrays."""
    B, m, _ = x.shape
    _, n, _ = y.shape
    xp = jnp.pad(x, ((0, 0), (0, m_pad - m), (0, 0)), constant_values=_SENTINEL)
    yp = jnp.pad(y, ((0, 0), (0, n_pad - n), (0, 0)), constant_values=_SENTINEL)

    x2 = jnp.sum(xp * xp, axis=-1, keepdims=True)           # (B, m_pad, 1)
    y2 = jnp.sum(yp * yp, axis=-1, keepdims=True)           # (B, n_pad, 1)
    zeros_x = jnp.zeros((B, m_pad, 3), jnp.float32)
    zeros_y = jnp.zeros((B, n_pad, 3), jnp.float32)

    x_aug = jnp.concatenate(
        [-2.0 * xp, x2, jnp.ones_like(x2), zeros_x], axis=-1)   # (B, m_pad, 8)
    x_aug = jnp.transpose(x_aug, (0, 2, 1))                     # (B, 8, m_pad)
    y_aug = jnp.concatenate(
        [yp, jnp.ones_like(y2), y2, zeros_y], axis=-1)          # (B, n_pad, 8)
    return x_aug, y_aug


@functools.partial(jax.jit, static_argnames=("tile_m", "tile_n"))
def chamfer_distance(x, y, *, tile_m=512, tile_n=512):
    """x: (B, m, 3), y: (B, n, 3) -> (B,) chamfer distance (PyTorch get_loss)."""
    assert tile_m % 128 == 0 and tile_n % 8 == 0
    B, m, _ = x.shape
    _, n, _ = y.shape
    x = x.astype(jnp.float32)
    y = y.astype(jnp.float32)

    m_pad = _ceil_to(m, 128)
    tm = min(tile_m, m_pad)
    m_pad = _ceil_to(m_pad, tm)
    n_pad = _ceil_to(n, 8)
    tn = min(tile_n, n_pad)
    n_pad = _ceil_to(n_pad, tn)
    nj, ni = n_pad // tn, m_pad // tm

    x_aug, y_aug = _augment(x, y, m_pad, n_pad)
    kernel = _make_chamfer_kernel(m, n, m_pad, tn, tm, nj, ni)

    out = pl.pallas_call(
        kernel,
        out_shape=jax.ShapeDtypeStruct((B, 8, 128), jnp.float32),
        grid_spec=pltpu.PrefetchScalarGridSpec(
            num_scalar_prefetch=0,
            grid=(B, nj, ni),
            in_specs=[
                pl.BlockSpec((1, tn, 8), lambda b, j, i: (b, j, 0)),   # y_aug
                pl.BlockSpec((1, 8, tm), lambda b, j, i: (b, 0, i)),   # x_aug
            ],
            out_specs=pl.BlockSpec((1, 8, 128), lambda b, j, i: (b, 0, 0)),
            scratch_shapes=[
                pltpu.VMEM((8, m_pad), jnp.float32),   # running column (per-x) min
                pltpu.VMEM((tn, 128), jnp.float32),    # running row (per-y) lane-partial min
            ],
        ),
        compiler_params=pltpu.CompilerParams(
            dimension_semantics=("parallel", "arbitrary", "arbitrary"),
        ),
    )(y_aug, x_aug)
    return out[:, 0, 0]


def chamfer_reference(x, y):
    # Pure-JAX reference mirroring the PyTorch module exactly.
    diff = jnp.linalg.norm(x[:, None, :, :] - y[:, :, None, :], axis=-1)  # (B, n, m)
    dis1 = jnp.min(diff, axis=1).mean(axis=1)
    dis2 = jnp.min(diff, axis=2).mean(axis=1)
    return dis1 + dis2


if __name__ == "__main__":
    key = jax.random.PRNGKey(0)
    kx, ky = jax.random.split(key)
    B, m, n = 2, 16, 8
    x = jax.random.normal(kx, (B, m, 3), dtype=jnp.float32)
    y = jax.random.normal(ky, (B, n, 3), dtype=jnp.float32)

    dis = jax.block_until_ready(chamfer_distance(x, y))
    ref = jax.block_until_ready(chamfer_reference(x, y))

    assert dis.shape == (B,)
    assert jnp.allclose(dis, ref, atol=1e-3, rtol=1e-3), (dis, ref)
    print("KERNEL_OK")
</pallas_src>

<mosaic_0001>
module attributes {stable_mosaic.version = 11 : i64} {
  func.func @kernel(%arg0: i32, %arg1: i32, %arg2: i32, %arg3: memref<1x8x8xf32, #tpu.memory_space<vmem>>, %arg4: memref<1x8x128xf32, #tpu.memory_space<vmem>>, %arg5: memref<1x8x128xf32, #tpu.memory_space<vmem>>, %arg6: memref<8x128xf32, #tpu.memory_space<vmem>>, %arg7: memref<8x128xf32, #tpu.memory_space<vmem>>) attributes {dimension_semantics = [#tpu.dimension_semantics<parallel>, #tpu.dimension_semantics<arbitrary>, #tpu.dimension_semantics<arbitrary>], iteration_bounds = array<i64: 2, 1, 1>, scalar_prefetch = 0 : i64, scratch_operands = 2 : i64, tpu.core_type = #tpu.core_type<tc>, window_params = [{transform_indices = @transform_0, window_bounds = array<i64: 1, 8, 8>}, {transform_indices = @transform_1, window_bounds = array<i64: 1, 8, 128>}, {transform_indices = @transform_2, window_bounds = array<i64: 1, 8, 128>}]} {
    %c0_i32 = arith.constant 0 : i32
    %0 = arith.cmpi eq, %arg1, %c0_i32 : i32
    %c0_i32_0 = arith.constant 0 : i32
    %1 = arith.cmpi eq, %arg2, %c0_i32_0 : i32
    %2 = arith.andi %0, %1 : i1
    %3 = arith.extui %2 : i1 to i32
    %c0_i32_1 = arith.constant 0 : i32
    %4 = arith.cmpi ne, %3, %c0_i32_1 : i32
    scf.if %4 {
      %cst_20 = arith.constant 0x7F800000 : f32
      %31 = vector.broadcast %cst_20 : f32 to vector<8x128xf32>
      %c0_21 = arith.constant 0 : index
      %c0_22 = arith.constant 0 : index
      %32 = vector.load %arg6[%c0_21, %c0_22] : memref<8x128xf32, #tpu.memory_space<vmem>>, vector<8x128xf32>
      tpu.vector_store %arg6[%c0_21, %c0_22], %31 {strides = array<i32>} : memref<8x128xf32, #tpu.memory_space<vmem>>, vector<8x128xf32>,
      %cst_23 = arith.constant 0.000000e+00 : f32
      %33 = vector.broadcast %cst_23 : f32 to vector<1x8x128xf32>
      %c0_24 = arith.constant 0 : index
      %c0_25 = arith.constant 0 : index
      %c0_26 = arith.constant 0 : index
      %34 = vector.load %arg5[%c0_24, %c0_25, %c0_26] : memref<1x8x128xf32, #tpu.memory_space<vmem>>, vector<1x8x128xf32>
      tpu.vector_store %arg5[%c0_24, %c0_25, %c0_26], %33 {strides = array<i32>} : memref<1x8x128xf32, #tpu.memory_space<vmem>>, vector<1x8x128xf32>,
    } else {
    }
    %c0_i32_2 = arith.constant 0 : i32
    %5 = arith.cmpi eq, %arg2, %c0_i32_2 : i32
    %6 = arith.extui %5 : i1 to i32
    %c0_i32_3 = arith.constant 0 : i32
    %7 = arith.cmpi ne, %6, %c0_i32_3 : i32
    scf.if %7 {
      %cst_20 = arith.constant 0x7F800000 : f32
      %31 = vector.broadcast %cst_20 : f32 to vector<8x128xf32>
      %c0_21 = arith.constant 0 : index
      %c0_22 = arith.constant 0 : index
      %32 = vector.load %arg7[%c0_21, %c0_22] : memref<8x128xf32, #tpu.memory_space<vmem>>, vector<8x128xf32>
      tpu.vector_store %arg7[%c0_21, %c0_22], %31 {strides = array<i32>} : memref<8x128xf32, #tpu.memory_space<vmem>>, vector<8x128xf32>,
    } else {
    }
    %c0 = arith.constant 0 : index
    %c0_4 = arith.constant 0 : index
    %c0_5 = arith.constant 0 : index
    %8 = vector.load %arg3[%c0, %c0_4, %c0_5] : memref<1x8x8xf32, #tpu.memory_space<vmem>>, vector<1x8x8xf32>
    %9 = vector.shape_cast %8 : vector<1x8x8xf32> to vector<8x8xf32>
    %c0_6 = arith.constant 0 : index
    %c0_7 = arith.constant 0 : index
    %c0_8 = arith.constant 0 : index
    %10 = vector.load %arg4[%c0_6, %c0_7, %c0_8] : memref<1x8x128xf32, #tpu.memory_space<vmem>>, vector<1x8x128xf32>
    %11 = vector.shape_cast %10 : vector<1x8x128xf32> to vector<8x128xf32>
    %cst = arith.constant dense<0.000000e+00> : vector<8x128xf32>
    %12 = tpu.matmul %9, %11, %cst {dimension_numbers = #tpu.dot_dimension_numbers<[1], [0], [0], [1], [0, 0, 1, 1], [], []>} : vector<8x8xf32>, vector<8x128xf32>, vector<8x128xf32> -> vector<8x128xf32>
    %c128_i32 = arith.constant 128 : i32
    %13 = arith.muli %arg2, %c128_i32 : i32
    %14 = tpu.assume_multiple %13, 128 : i32
    %c0_9 = arith.constant 0 : index
    %15 = arith.index_cast %14 : i32 to index
    %16 = vector.load %arg6[%c0_9, %15] : memref<8x128xf32, #tpu.memory_space<vmem>>, vector<8x128xf32>
    %17 = arith.minimumf %16, %12 : vector<8x128xf32>
    %c0_10 = arith.constant 0 : index
    %18 = arith.index_cast %14 : i32 to index
    %19 = vector.load %arg6[%c0_10, %18] : memref<8x128xf32, #tpu.memory_space<vmem>>, vector<8x128xf32>
    tpu.vector_store %arg6[%c0_10, %18], %17 {strides = array<i32>} : memref<8x128xf32, #tpu.memory_space<vmem>>, vector<8x128xf32>,
    %c0_11 = arith.constant 0 : index
    %c0_12 = arith.constant 0 : index
    %20 = vector.load %arg7[%c0_11, %c0_12] : memref<8x128xf32, #tpu.memory_space<vmem>>, vector<8x128xf32>
    %21 = arith.minimumf %20, %12 : vector<8x128xf32>
    %c0_13 = arith.constant 0 : index
    %c0_14 = arith.constant 0 : index
    %22 = vector.load %arg7[%c0_13, %c0_14] : memref<8x128xf32, #tpu.memory_space<vmem>>, vector<8x128xf32>
    tpu.vector_store %arg7[%c0_13, %c0_14], %21 {strides = array<i32>} : memref<8x128xf32, #tpu.memory_space<vmem>>, vector<8x128xf32>,
    %c0_i32_15 = arith.constant 0 : i32
    %23 = arith.cmpi eq, %arg2, %c0_i32_15 : i32
    %24 = arith.extui %23 : i1 to i32
    %c0_i32_16 = arith.constant 0 : i32
    %25 = arith.cmpi ne, %24, %c0_i32_16 : i32
    scf.if %25 {
      %c0_20 = arith.constant 0 : index
      %c0_21 = arith.constant 0 : index
      %31 = vector.load %arg7[%c0_20, %c0_21] : memref<8x128xf32, #tpu.memory_space<vmem>>, vector<8x128xf32>
      %cst_22 = arith.constant dense<0x7F800000> : vector<8xf32>
      %32 = vector.multi_reduction <minimumf>, %31, %cst_22 [1] : vector<8x128xf32> to vector<8xf32>
      %33 = vector.shape_cast %32 : vector<8xf32> to vector<8x1xf32>
      %cst_23 = arith.constant 0.000000e+00 : f32
      %34 = vector.broadcast %cst_23 : f32 to vector<8x1xf32>
      %35 = arith.maximumf %33, %34 : vector<8x1xf32>
      %36 = math.sqrt %35 : vector<8x1xf32>
      %c8_i32 = arith.constant 8 : i32
      %37 = arith.muli %arg1, %c8_i32 : i32
      %38 = tpu.iota {dimensions = array<i32: 0>} : vector<8x1xi32>
      %39 = vector.broadcast %37 : i32 to vector<8x1xi32>
      %40 = arith.addi %39, %38 : vector<8x1xi32>
      %c8_i32_24 = arith.constant 8 : i32
      %41 = vector.broadcast %c8_i32_24 : i32 to vector<8x1xi32>
      %42 = arith.cmpi slt, %40, %41 : vector<8x1xi32>
      %cst_25 = arith.constant 0.000000e+00 : f32
      %43 = vector.broadcast %cst_25 : f32 to vector<8x1xf32>
      %44 = arith.select %42, %36, %43 : vector<8x1xi1>, vector<8x1xf32>
      %cst_26 = arith.constant dense<0.000000e+00> : vector<1xf32>
      %45 = vector.multi_reduction <add>, %44, %cst_26 [0] : vector<8x1xf32> to vector<1xf32>
      %46 = vector.shape_cast %45 : vector<1xf32> to vector<1x1xf32>
      %c0_27 = arith.constant 0 : index
      %c0_28 = arith.constant 0 : index
      %c0_29 = arith.constant 0 : index
      %47 = vector.load %arg5[%c0_27, %c0_28, %c0_29] : memref<1x8x128xf32, #tpu.memory_space<vmem>>, vector<1x8x128xf32>
      %cst_30 = arith.constant 1.250000e-01 : f32
      %48 = vector.broadcast %cst_30 : f32 to vector<1x1xf32>
      %49 = arith.mulf %46, %48 : vector<1x1xf32>
      %50 = vector.shape_cast %49 : vector<1x1xf32> to vector<1x1x1xf32>
      %51 = vector.broadcast %50 : vector<1x1x1xf32> to vector<1x8x128xf32>
      %52 = arith.addf %47, %51 : vector<1x8x128xf32>
      %c0_31 = arith.constant 0 : index
      %c0_32 = arith.constant 0 : index
      %c0_33 = arith.constant 0 : index
      %53 = vector.load %arg5[%c0_31, %c0_32, %c0_33] : memref<1x8x128xf32, #tpu.memory_space<vmem>>, vector<1x8x128xf32>
      tpu.vector_store %arg5[%c0_31, %c0_32, %c0_33], %52 {strides = array<i32>} : memref<1x8x128xf32, #tpu.memory_space<vmem>>, vector<1x8x128xf32>,
    } else {
    }
    %c0_i32_17 = arith.constant 0 : i32
    %26 = arith.cmpi eq, %arg1, %c0_i32_17 : i32
    %c0_i32_18 = arith.constant 0 : i32
    %27 = arith.cmpi eq, %arg2, %c0_i32_18 : i32
    %28 = arith.andi %26, %27 : i1
    %29 = arith.extui %28 : i1 to i32
    %c0_i32_19 = arith.constant 0 : i32
    %30 = arith.cmpi ne, %29, %c0_i32_19 : i32
    scf.if %30 {
      %c0_20 = arith.constant 0 : index
      %c0_21 = arith.constant 0 : index
      %31 = vector.load %arg6[%c0_20, %c0_21] : memref<8x128xf32, #tpu.memory_space<vmem>>, vector<8x128xf32>
      %cst_22 = arith.constant dense<0x7F800000> : vector<128xf32>
      %32 = vector.multi_reduction <minimumf>, %31, %cst_22 [0] : vector<8x128xf32> to vector<128xf32>
      %33 = vector.shape_cast %32 : vector<128xf32> to vector<1x128xf32>
      %cst_23 = arith.constant 0.000000e+00 : f32
      %34 = vector.broadcast %cst_23 : f32 to vector<1x128xf32>
      %35 = arith.maximumf %33, %34 : vector<1x128xf32>
      %36 = math.sqrt %35 : vector<1x128xf32>
      %37 = tpu.iota {dimensions = array<i32: 1>} : vector<1x128xi32>
      %c16_i32 = arith.constant 16 : i32
      %38 = vector.broadcast %c16_i32 : i32 to vector<1x128xi32>
      %39 = arith.cmpi slt, %37, %38 : vector<1x128xi32>
      %cst_24 = arith.constant 0.000000e+00 : f32
      %40 = vector.broadcast %cst_24 : f32 to vector<1x128xf32>
      %41 = arith.select %39, %36, %40 : vector<1x128xi1>, vector<1x128xf32>
      %cst_25 = arith.constant dense<0.000000e+00> : vector<1xf32>
      %42 = vector.multi_reduction <add>, %41, %cst_25 [1] : vector<1x128xf32> to vector<1xf32>
      %43 = vector.shape_cast %42 : vector<1xf32> to vector<1x1xf32>
      %c0_26 = arith.constant 0 : index
      %c0_27 = arith.constant 0 : index
      %c0_28 = arith.constant 0 : index
      %44 = vector.load %arg5[%c0_26, %c0_27, %c0_28] : memref<1x8x128xf32, #tpu.memory_space<vmem>>, vector<1x8x128xf32>
      %cst_29 = arith.constant 6.250000e-02 : f32
      %45 = vector.broadcast %cst_29 : f32 to vector<1x1xf32>
      %46 = arith.mulf %43, %45 : vector<1x1xf32>
      %47 = vector.shape_cast %46 : vector<1x1xf32> to vector<1x1x1xf32>
      %48 = vector.broadcast %47 : vector<1x1x1xf32> to vector<1x8x128xf32>
      %49 = arith.addf %44, %48 : vector<1x8x128xf32>
      %c0_30 = arith.constant 0 : index
      %c0_31 = arith.constant 0 : index
      %c0_32 = arith.constant 0 : index
      %50 = vector.load %arg5[%c0_30, %c0_31, %c0_32] : memref<1x8x128xf32, #tpu.memory_space<vmem>>, vector<1x8x128xf32>
      tpu.vector_store %arg5[%c0_30, %c0_31, %c0_32], %49 {strides = array<i32>} : memref<1x8x128xf32, #tpu.memory_space<vmem>>, vector<1x8x128xf32>,
    } else {
    }
    return
  }
  func.func @transform_0(%arg0: i32, %arg1: i32, %arg2: i32) -> (i32, i32, i32) {
    %c0_i32 = arith.constant 0 : i32
    %c0_i32_0 = arith.constant 0 : i32
    return %arg0, %arg1, %c0_i32 : i32, i32, i32
  }
  func.func @transform_1(%arg0: i32, %arg1: i32, %arg2: i32) -> (i32, i32, i32) {
    %c0_i32 = arith.constant 0 : i32
    %c0_i32_0 = arith.constant 0 : i32
    return %arg0, %c0_i32, %arg2 : i32, i32, i32
  }
  func.func @transform_2(%arg0: i32, %arg1: i32, %arg2: i32) -> (i32, i32, i32) {
    %c0_i32 = arith.constant 0 : i32
    %c0_i32_0 = arith.constant 0 : i32
    %c0_i32_1 = arith.constant 0 : i32
    return %arg0, %c0_i32, %c0_i32_0 : i32, i32, i32
  }
}

</mosaic_0001>

<llo_original>
// kernel: chamfer_distance.1
$region0: #{chamfer_distance.1}
  #allocation0 [shape = 'u32[]', space=smem, size = 0x4, offset = 0x4, fixed_abs, tag = 'smem constant byte address 0x4 - core index']
  #allocation1 [shape = 'u32[144,128]{1,0:T(1,128)}', space=vmem, size = 0x12000, scoped, tag = 'internal scratch']
  #allocation2 [shape = 'f32[8,128]{1,0:T(8,128)}', space=vmem, size = 0x1000, scoped, tag = 'scratch operand']
  #allocation3 [shape = 'f32[8,128]{1,0:T(8,128)}', space=vmem, size = 0x1000, scoped, tag = 'scratch operand']
  %s0 = inlined_call_operand.vmem [shape: f32[2,8,8], index: 0, kind: input, shape index: {}]
  %s1 = inlined_call_operand.vmem [shape: f32[2,8,128], index: 1, kind: input, shape index: {}]
  %s2 = inlined_call_operand.vmem [shape: f32[2,8,128], index: 2, kind: output, shape index: {}]
  %s3 = sld [smem:[#allocation0]]
  $region57: #{chamfer_distance.1} parent=0
    _
  %s5 = ssub.s32 1, %s3
  %s6 = scalar_select 0, %s5, %s3
  loop: start=0, step=1, limit=4
  $region2: #{chamfer_distance.1} parent=0 // loop_pre_header
    _
  $region3: #{chamfer_distance.1} parent=0 // loop_header
    %s8 = sphi 0, %s12
    %p9 = scmp.ge.s32.totalorder %s8, 4
    %s15 = sphi 0, %s34
    %s16 = sphi 0, %s30
    %s17 = sphi 0, %s26
    %s18 = sphi 0, %s15
    %s19 = sphi 0, %s16
    %s20 = sphi 0, %s17
    %s21 = sphi 0, %s18
    %s22 = sphi 0, %s19
    %s23 = sphi 0, %s20
    %s39 = sphi 0, %s41
    %s42 = sphi 0, %s39
    %s43 = sphi 0, %s42
    %s59 = sphi 0, %s43
    %s67 = sphi 0, %s69
    %s70 = sphi 0, %s67
    %s71 = sphi 0, %s70
    %s87 = sphi 0, %s71
    %s93 = sphi 0, %s95
    %s96 = sphi 0, %s93
    %s97 = sphi 0, %s96
    %s113 = sphi 0, %s97
  $region4: #{chamfer_distance.1} parent=0 // loop_header_branch
    %11 = sbr.rel (%p9) target = $region8
  $region5: #{chamfer_distance.1} parent=0 // loop_body
    %s13 = ssub.s32 %s8, 1
    %s14 = ssub.s32 %s8, 2
    %s24 = sadd.s32 1, %s17
    %p25 = scmp.ge.s32.totalorder %s24, 1
    %s26 = scalar_select %p25, 0, %s24
    %s27 = sadd.s32 1, %s16
    %s28 = scalar_select %p25, %s27, %s16
    %p29 = scmp.ge.s32.totalorder %s28, 1
    %s30 = scalar_select %p29, 0, %s28
    %s31 = sadd.s32 1, %s15
    %s32 = scalar_select %p29, %s31, %s15
    %p33 = scmp.ge.s32.totalorder %s32, 2
    %s34 = scalar_select %p33, 0, %s32
    %s35 = ssub.s32 %s15, %s34
    %s36 = ssub.s32 %s16, %s30
    %s37 = sor.u32 %s35, %s36
    %p38 = scmp.eq.s32.totalorder %s37, 0
    %s40 = sadd.s32 %s39, 1
    %s41 = scalar_select %p38, %s39, %s40
    %p44 = pneg %p38
    %p45 = scmp.eq.s32.totalorder %s8, 1
    %p46 = por %p44, %p45
    %p47 = scmp.ne.s32.totalorder %s39, %s42
    %p48 = scmp.eq.s32.totalorder %s8, 0
    %p49 = por %p47, %p48
    %p50 = scmp.ne.s32.totalorder %s39, %s42
    %p51 = scmp.eq.s32.totalorder %s13, 1
    %p52 = por %p50, %p51
    %p53 = scmp.ne.s32.totalorder %s42, %s43
    %p54 = scmp.eq.s32.totalorder %s13, 0
    %p55 = por %p53, %p54
    %p56 = scmp.ne.s32.totalorder %s42, %s43
    %p57 = scmp.eq.s32.totalorder %s14, 1
    %p58 = por %p56, %p57
    %p60 = scmp.ne.s32.totalorder %s43, %s59
    %p61 = scmp.eq.s32.totalorder %s14, 0
    %p62 = por %p60, %p61
    %s63 = ssub.s32 %s15, %s34
    %s64 = ssub.s32 %s17, %s26
    %s65 = sor.u32 %s63, %s64
    %p66 = scmp.eq.s32.totalorder %s65, 0
    %s68 = sadd.s32 %s67, 1
    %s69 = scalar_select %p66, %s67, %s68
    %p72 = pneg %p66
    %p73 = scmp.eq.s32.totalorder %s8, 1
    %p74 = por %p72, %p73
    %p75 = scmp.ne.s32.totalorder %s67, %s70
    %p76 = scmp.eq.s32.totalorder %s8, 0
    %p77 = por %p75, %p76
    %p78 = scmp.ne.s32.totalorder %s67, %s70
    %p79 = scmp.eq.s32.totalorder %s13, 1
    %p80 = por %p78, %p79
    %p81 = scmp.ne.s32.totalorder %s70, %s71
    %p82 = scmp.eq.s32.totalorder %s13, 0
    %p83 = por %p81, %p82
    %p84 = scmp.ne.s32.totalorder %s70, %s71
    %p85 = scmp.eq.s32.totalorder %s14, 1
    %p86 = por %p84, %p85
    %p88 = scmp.ne.s32.totalorder %s71, %s87
    %p89 = scmp.eq.s32.totalorder %s14, 0
    %p90 = por %p88, %p89
    %s91 = ssub.s32 %s15, %s34
    %p92 = scmp.eq.s32.totalorder %s91, 0
    %s94 = sadd.s32 %s93, 1
    %s95 = scalar_select %p92, %s93, %s94
    %p98 = pneg %p92
    %p99 = scmp.eq.s32.totalorder %s8, 1
    %p100 = por %p98, %p99
    %p101 = scmp.ne.s32.totalorder %s93, %s96
    %p102 = scmp.eq.s32.totalorder %s8, 0
    %p103 = por %p101, %p102
    %p104 = scmp.ne.s32.totalorder %s93, %s96
    %p105 = scmp.eq.s32.totalorder %s13, 1
    %p106 = por %p104, %p105
    %p107 = scmp.ne.s32.totalorder %s96, %s97
    %p108 = scmp.eq.s32.totalorder %s13, 0
    %p109 = por %p107, %p108
    %p110 = scmp.ne.s32.totalorder %s96, %s97
    %p111 = scmp.eq.s32.totalorder %s14, 1
    %p112 = por %p110, %p111
    %p114 = scmp.ne.s32.totalorder %s97, %s113
    %p115 = scmp.eq.s32.totalorder %s14, 0
    %p116 = por %p114, %p115
    %p117 = scmp.le.s32.totalorder 1, %s8
    %p118 = scmp.lt.s32.totalorder %s8, 3
    %p119 = pnand %p117, %p118
    %p120 = pneg %p119
    // Predicated region
    $region9: #{chamfer_distance.1} parent=5 // pred_check
      _
    $region10: #{chamfer_distance.1} parent=5 // pred_check_branch
      %122 = sbr.rel (%p119) target = $region12
    $region11: #{chamfer_distance.1} parent=5 // pred_region
      %s123 = ssub.s32 %s8, 1
    $region12: #{chamfer_distance.1} parent=5 // pred_fallthru
      _
    %p124 = scmp.lt.s32.totalorder %s8, 2
    // Predicated region
    $region13: #{chamfer_distance.1} parent=5 // pred_check
      %p125 = pneg %p124
    $region14: #{chamfer_distance.1} parent=5 // pred_check_branch
      %127 = sbr.rel (%p125) target = $region16
    $region15: #{chamfer_distance.1} parent=5 // pred_region
      // Predicated region
      $region17: #{chamfer_distance.1} parent=15 // pred_check
        %p128 = pneg %p49
      $region18: #{chamfer_distance.1} parent=15 // pred_check_branch
        %130 = sbr.rel (%p128) target = $region20
      $region19: #{chamfer_distance.1} parent=15 // pred_region
        %p131 = scmp.lt.s32.totalorder %s15, 1
        %s132 = scalar_select %p131, %s15, 1
        %p133 = scmp.lt.s32.totalorder %s16, 0
        %s134 = scalar_select %p133, %s16, 0
        %s135 = sadd.s32 %s134, %s132
        %s136 = smul.addr %s135, 8
        %s137 = scalar_lea.vmem %s0, %s136
      $region20: #{chamfer_distance.1} parent=15 // pred_fallthru
        _
      // Predicated region
      $region21: #{chamfer_distance.1} parent=15 // pred_check
        %p138 = pneg %p77
      $region22: #{chamfer_distance.1} parent=15 // pred_check_branch
        %140 = sbr.rel (%p138) target = $region24
      $region23: #{chamfer_distance.1} parent=15 // pred_region
        %p141 = scmp.lt.s32.totalorder %s15, 1
        %s142 = scalar_select %p141, %s15, 1
        %p143 = scmp.lt.s32.totalorder %s17, 0
        %s144 = scalar_select %p143, %s17, 0
        %s145 = sadd.s32 %s144, %s142
        %s146 = smul.addr %s145, 8
        %s147 = scalar_lea.vmem %s1, %s146
      $region24: #{chamfer_distance.1} parent=15 // pred_fallthru
        _
    $region16: #{chamfer_distance.1} parent=5 // pred_fallthru
      _
    %p148 = scmp.le.s32.totalorder 1, %s8
    %p149 = scmp.lt.s32.totalorder %s8, 3
    %p150 = pnand %p148, %p149
    %p151 = pneg %p150
    // Predicated region
    $region25: #{chamfer_distance.1} parent=5 // pred_check
      _
    $region26: #{chamfer_distance.1} parent=5 // pred_check_branch
      %153 = sbr.rel (%p150) target = $region28
    $region27: #{chamfer_distance.1} parent=5 // pred_region
      %s154 = ssub.s32 %s8, 1
      %p155 = scmp.lt.s32.totalorder %s18, 1
      %s156 = scalar_select %p155, %s18, 1
      %p157 = scmp.lt.s32.totalorder %s19, 0
      %s158 = scalar_select %p157, %s19, 0
      %s159 = sadd.s32 %s158, %s156
      %s160 = smul.addr %s159, 8
      %s161 = scalar_lea.vmem %s0, %s160
      %p162 = pneg %p55
      %p163 = pneg %p52
      %p164 = scmp.lt.s32.totalorder %s18, 1
      %s165 = scalar_select %p164, %s18, 1
      %p166 = scmp.lt.s32.totalorder %s20, 0
      %s167 = scalar_select %p166, %s20, 0
      %s168 = sadd.s32 %s167, %s165
      %s169 = smul.addr %s168, 8
      %s170 = scalar_lea.vmem %s1, %s169
      %p171 = pneg %p83
      %p172 = pneg %p80
      %p173 = pneg %p109
      %p174 = pneg %p106
      %p175 = scmp.lt.s32.totalorder %s18, 1
      %s176 = scalar_select %p175, %s18, 1
      %s177 = smul.addr %s176, 8
      %s178 = scalar_lea.vmem %s2, %s177
      %p179 = scmp.lt.s32.totalorder %s18, 1
      %s180 = scalar_select %p179, %s18, 1
      %p181 = scmp.lt.s32.totalorder %s19, 0
      %s182 = scalar_select %p181, %s19, 0
      %s183 = sadd.s32 %s182, %s180
      %s184 = smul.addr %s183, 8
      %s185 = scalar_lea.vmem %s0, %s184
      %p186 = scmp.lt.s32.totalorder %s18, 1
      %s187 = scalar_select %p186, %s18, 1
      %p188 = scmp.lt.s32.totalorder %s20, 0
      %s189 = scalar_select %p188, %s20, 0
      %s190 = sadd.s32 %s189, %s187
      %s191 = smul.addr %s190, 8
      %s192 = scalar_lea.vmem %s1, %s191
      %p193 = scmp.lt.s32.totalorder %s18, 1
      %s194 = scalar_select %p193, %s18, 1
      %s195 = smul.addr %s194, 8
      %s196 = scalar_lea.vmem %s2, %s195
      %p197 = scmp.eq.s32.totalorder %s19, 0
      %p198 = scmp.eq.s32.totalorder %s20, 0
      %p199 = pnand %p197, %p198
      %p200 = pneg %p199
      // Predicated region
      $region29: #{chamfer_distance.1} parent=27 // pred_check
        _
      $region30: #{chamfer_distance.1} parent=27 // pred_check_branch
        %202 = sbr.rel (%p199) target = $region32
      $region31: #{chamfer_distance.1} parent=27 // pred_region
        %203 = vst [vmem:[#allocation2] sm:$0xff] inf
        %204 = vst [vmem:[%s196] sm:$0xff] 0.0
      $region32: #{chamfer_distance.1} parent=27 // pred_fallthru
        _
      // Predicated region
      $region33: #{chamfer_distance.1} parent=27 // pred_check
        %p205 = pneg %p198
      $region34: #{chamfer_distance.1} parent=27 // pred_check_branch
        %207 = sbr.rel (%p205) target = $region36
      $region35: #{chamfer_distance.1} parent=27 // pred_region
        %208 = vst [vmem:[#allocation3] sm:$0xff] inf
      $region36: #{chamfer_distance.1} parent=27 // pred_fallthru
        _
      %v209 = vld [vmem:[%s185] sm:$0xff]
      %v210 = vld [vmem:[%s192] sm:$0xff]
      %vm211 = vcmask 64512
      %v213 = vsel %vm211, %v209, 0
      %215 = vmatprep.subr.mxu0 0.0
      %216 = vmatpush1.msra.mxu0 %v210
      %217 = vmatprep.subr.mxu0 0.0
      %218 = vmatpush1.msra.mxu0 0.0
      %219 = vmatprep.subr.mxu0 0.0
      %220 = vmatpush1.msra.mxu0 0.0
      %221 = vmatprep.subr.mxu0 0.0
      %222 = vmatpush1.msra.mxu0 0.0
      %223 = vmatprep.subr.mxu0 0.0
      %224 = vmatpush1.msra.mxu0 0.0
      %225 = vmatprep.subr.mxu0 0.0
      %226 = vmatpush1.msra.mxu0 0.0
      %227 = vmatprep.subr.mxu0 0.0
      %228 = vmatpush1.msra.mxu0 0.0
      %229 = vmatprep.subr.mxu0 0.0
      %230 = vmatpush1.msra.mxu0 0.0
      %231 = vmatprep.subr.mxu0 0.0
      %232 = vmatpush1.msra.mxu0 0.0
      %233 = vmatprep.subr.mxu0 0.0
      %234 = vmatpush1.msra.mxu0 0.0
      %235 = vmatprep.subr.mxu0 0.0
      %236 = vmatpush1.msra.mxu0 0.0
      %237 = vmatprep.subr.mxu0 0.0
      %238 = vmatpush1.msra.mxu0 0.0
      %239 = vmatprep.subr.mxu0 0.0
      %240 = vmatpush1.msra.mxu0 0.0
      %241 = vmatprep.subr.mxu0 0.0
      %242 = vmatpush1.msra.mxu0 0.0
      %243 = vmatprep.subr.mxu0 0.0
      %244 = vmatpush1.msra.mxu0 0.0
      %245 = vmatprep.subr.mxu0 0.0
      %246 = vmatpush1.msra.mxu0 0.0
      %247 = vmatprep.subr.mxu0 0.0
      %248 = vmatpush1.msra.mxu0 0.0
      %249 = vmatprep.subr.mxu0 0.0
      %250 = vmatpush1.msra.mxu0 0.0
      %251 = vmatprep.subr.mxu0 0.0
      %252 = vmatpush1.msra.mxu0 0.0
      %253 = vmatprep.subr.mxu0 0.0
      %254 = vmatpush1.msra.mxu0 0.0
      %255 = vmatprep.subr.mxu0 0.0
      %256 = vmatpush1.msra.mxu0 0.0
      %257 = vmatprep.subr.mxu0 0.0
      %258 = vmatpush1.msra.mxu0 0.0
      %259 = vmatprep.subr.mxu0 0.0
      %260 = vmatpush1.msra.mxu0 0.0
      %261 = vmatprep.subr.mxu0 0.0
      %262 = vmatpush1.msra.mxu0 0.0
      %263 = vmatprep.subr.mxu0 0.0
      %264 = vmatpush1.msra.mxu0 0.0
      %265 = vmatprep.subr.mxu0 0.0
      %266 = vmatpush1.msra.mxu0 0.0
      %267 = vmatprep.subr.mxu0 0.0
      %268 = vmatpush1.msra.mxu0 0.0
      %269 = vmatprep.subr.mxu0 0.0
      %270 = vmatpush1.msra.mxu0 0.0
      %271 = vmatprep.subr.mxu0 0.0
      %272 = vmatpush1.msra.mxu0 0.0
      %273 = vmatprep.subr.mxu0 0.0
      %274 = vmatpush1.msra.mxu0 0.0
      %275 = vmatprep.subr.mxu0 0.0
      %276 = vmatpush1.msra.mxu0 0.0
      %277 = vmatprep.subr.mxu0 0.0
      %278 = vmatpush1.msra.mxu0 0.0
      %279 = vmatprep.mubr.f32.mxu0 0.0
      %280 = vmatmul.mubr.f32.gmra.mrb[0].mxu0 %v213
      %v281 = vpop.f32.mrb[0].mxu0
      %v282 = vadd.f32 0.0, %v281
      %v283 = vpop.f32.mrb[0].mxu0
      %284 = vdwg.mxu0
      %s285 = smul.u32 %s20, 128
      %s286 = sshra.s32 %s285, 7
      %s287 = sand.u32 %s285, 127
      %s288 = scalar_lea.vmem [#allocation2], %s286
      %v289 = vld [vmem:[%s288] sm:$0xff]
      %v290 = vmin.f32 %v289, %v282
      %291 = vst [vmem:[%s288] sm:$0xff] %v290
      %v292 = vld [vmem:[#allocation3] sm:$0xff]
      %v293 = vmin.f32 %v292, %v282
      %294 = vst [vmem:[#allocation3] sm:$0xff] %v293
      // Predicated region
      $region37: #{chamfer_distance.1} parent=27 // pred_check
        %p295 = pneg %p198
      $region38: #{chamfer_distance.1} parent=27 // pred_check_branch
        %297 = sbr.rel (%p295) target = $region40
      $region39: #{chamfer_distance.1} parent=27 // pred_region
        %v298 = vld [vmem:[#allocation3] sm:$0xff]
        %299 = vmin.xlane.f32.xlu0 %v298
        %v300 = vpop.xlane.xlu0 %299
        %v301 = vmax.f32 %v300, 0.0
        %v302 = vrsqrt.pop %v301
        %v303 = vmul.f32 %v301, %v302
        %vm304 = vcmp.eq.f32.partialorder %v301, inf
        %v305 = vsel %vm304, %v301, %v303
        %vm306 = vcmp.eq.f32.partialorder %v301, 0.0
        %v307 = vand.u32 %v301, 2147483648
        %v308 = vsel %vm306, %v307, %v305
        %s309 = smul.u32 %s19, 8
        %v310 = vlaneseq
        %v311 = vshrl.u32 %v310, 7
        %v312 = vstv %s309
        %v313 = vadd.s32 %v312, %v311
        %vm314 = vcmp.lt.s32.totalorder %v313, 8
        %v315 = vsel %vm314, %v308, 0.0
        %v316 = vrot.slane %v315, 4
        %v317 = vadd.f32 %v315, %v316
        %v318 = vrot.slane %v317, 2
        %v319 = vadd.f32 %v317, %v318
        %v320 = vrot.slane %v319, 1
        %v321 = vadd.f32 %v319, %v320
        %v322 = vld [vmem:[%s196] sm:$0xff]
        %v323 = vmul.f32 %v321, 0.125
        %v324 = vadd.f32 %v322, %v323
        %325 = vst [vmem:[%s196] sm:$0xff] %v324
      $region40: #{chamfer_distance.1} parent=27 // pred_fallthru
        _
      // Predicated region
      $region41: #{chamfer_distance.1} parent=27 // pred_check
        _
      $region42: #{chamfer_distance.1} parent=27 // pred_check_branch
        %327 = sbr.rel (%p199) target = $region44
      $region43: #{chamfer_distance.1} parent=27 // pred_region
        %v328 = vld [vmem:[#allocation2] sm:$0xff]
        %v329 = vrot.slane %v328, 4
        %v330 = vmin.f32 %v328, %v329
        %v331 = vrot.slane %v330, 2
        %v332 = vmin.f32 %v330, %v331
        %v333 = vrot.slane %v332, 1
        %v334 = vmin.f32 %v332, %v333
        %v335 = vmax.f32 %v334, 0.0
        %v336 = vrsqrt.pop %v335
        %v337 = vmul.f32 %v335, %v336
        %vm338 = vcmp.eq.f32.partialorder %v335, inf
        %v339 = vsel %vm338, %v335, %v337
        %vm340 = vcmp.eq.f32.partialorder %v335, 0.0
        %v341 = vand.u32 %v335, 2147483648
        %v342 = vsel %vm340, %v341, %v339
        %v343 = vlaneseq
        %v344 = vand.u32 %v343, 127
        %vm345 = vcmp.lt.s32.totalorder %v344, 16
        %v346 = vsel %vm345, %v342, 0.0
        %347 = vadd.xlane.f32.xlu0 %v346
        %v348 = vpop.xlane.xlu0 %347
        %v349 = vld [vmem:[%s196] sm:$0xff]
        %v350 = vmul.f32 %v348, 0.0625
        %v351 = vadd.f32 %v349, %v350
        %352 = vst [vmem:[%s196] sm:$0xff] %v351
      $region44: #{chamfer_distance.1} parent=27 // pred_fallthru
        _
      %p353 = scmp.lt.s32.totalorder %s18, 1
      %s354 = scalar_select %p353, %s18, 1
      %s355 = smul.addr %s354, 8
      %s356 = scalar_lea.vmem %s2, %s355
      // Predicated region
      $region45: #{chamfer_distance.1} parent=27 // pred_check
        %p357 = pneg %p106
      $region46: #{chamfer_distance.1} parent=27 // pred_check_branch
        %359 = sbr.rel (%p357) target = $region48
      $region47: #{chamfer_distance.1} parent=27 // pred_region
        _
      $region48: #{chamfer_distance.1} parent=27 // pred_fallthru
        _
    $region28: #{chamfer_distance.1} parent=5 // pred_fallthru
      _
    %p360 = scmp.le.s32.totalorder 2, %s8
    // Predicated region
    $region49: #{chamfer_distance.1} parent=5 // pred_check
      %p361 = pneg %p360
    $region50: #{chamfer_distance.1} parent=5 // pred_check_branch
      %363 = sbr.rel (%p361) target = $region52
    $region51: #{chamfer_distance.1} parent=5 // pred_region
      %s364 = ssub.s32 %s8, 2
      // Predicated region
      $region53: #{chamfer_distance.1} parent=51 // pred_check
        %p365 = pneg %p112
      $region54: #{chamfer_distance.1} parent=51 // pred_check_branch
        %367 = sbr.rel (%p365) target = $region56
      $region55: #{chamfer_distance.1} parent=51 // pred_region
        %p368 = scmp.lt.s32.totalorder %s21, 1
        %s369 = scalar_select %p368, %s21, 1
        %s370 = smul.addr %s369, 8
        %s371 = scalar_lea.vmem %s2, %s370
      $region56: #{chamfer_distance.1} parent=51 // pred_fallthru
        _
    $region52: #{chamfer_distance.1} parent=5 // pred_fallthru
      _
  $region6: #{chamfer_distance.1} parent=0 // loop_footer
    %s12 = sadd.s32 1, %s8
  $region7: #{chamfer_distance.1} parent=0 // loop_footer_branch
    %7 = sbr.rel target = $region3
  $region8: #{chamfer_distance.1} parent=0 // loop_exit
    _

</llo_original>
